<compile_context>
chip_gen: v7x
topology: tpu7x:2x2x1
jax: 0.10.0
libtpu: 0.0.40
codegen_flags: <defaults>
</compile_context>

<pallas_src>
import jax
import jax.numpy as jnp
from jax.experimental import pallas as pl
from jax.experimental.pallas import tpu as pltpu

_EPS = 1e-6                            # torch pairwise_distance default eps
_VMEM_TILE_BUDGET = 20 * 1024 * 1024   # bytes for pipelined inputs + temporaries
_VMEM_LIMIT = 32 * 1024 * 1024         # scoped-VMEM limit: safe on v5e/v6e/v7x
_MAX_TB = 8192                         # cap on rows per tile
_LANE = 128


def _cdiv(a, b):
    return -(-a // b)


def _round_up(a, b):
    return _cdiv(a, b) * b


def _num_tensorcores_per_device():
    """TensorCores a single Pallas kernel can shard a 'parallel' axis over."""
    try:
        kind = jax.devices()[0].device_kind.lower()
    except Exception:  # pragma: no cover - defensive
        return 1
    if any(t in kind for t in ("v2", "v3", "v5e", "v5 lite", "v5lite", "v6")):
        return 1                        # one TensorCore per chip (v5e / v6e / older)
    if "v7" in kind:
        return 2                        # v7x: 2 TCs share the kernel via 'parallel'
    if "v4" in kind or "v5" in kind:    # v4 / v5p megacore
        return 2
    return 1


def _make_kernel(margin):
    margin = float(margin)

    def kernel(x1_ref, x2_ref, lbl_ref, out_ref):
        i = pl.program_id(1)                       # reduction axis over row-tiles

        @pl.when(i == 0)
        def _init():
            out_ref[...] = jnp.zeros_like(out_ref)

        x1 = x1_ref[...].astype(jnp.float32)       # (tb, D)
        x2 = x2_ref[...].astype(jnp.float32)       # (tb, D)
        lbl = lbl_ref[...].astype(jnp.float32)     # (1, tb), lane-dense

        diff = x1 - x2 + _EPS                      # eps added to the difference
        sq_el = diff * diff                        # (tb, D)

        # Row-wise sum of squares on the (otherwise idle) MXU instead of XLU
        # lane rotates: every lane of `sq` holds that row's d^2.
        d = x1.shape[-1]
        ones_dx = jnp.ones((d, _LANE), jnp.float32)
        sq = jnp.dot(sq_el, ones_dx, preferred_element_type=jnp.float32)   # (tb, 128)

        dist = jnp.sqrt(sq)                                # EUP
        hinge = jnp.maximum(margin - dist, 0.0)
        h2 = hinge * hinge                                 # (tb, 128), lane-replicated

        # Label-weighted row reductions also via MXU matvecs; labels stay
        # lane-dense so there is no transpose / sublane-sparse column math.
        pos = jnp.dot(lbl, sq, preferred_element_type=jnp.float32)         # (1, 128)
        neg = jnp.dot(1.0 - lbl, h2, preferred_element_type=jnp.float32)   # (1, 128)

        # Because sq / h2 are lane-replicated, every lane of (pos + neg) equals
        # this tile's partial loss sum.  Broadcast-accumulate it over the whole
        # resident (8, 128) output tile: INVARIANT (used by the wrapper) -- every
        # element of core c's output block holds core c's running partial sum.
        out_ref[...] += pos + neg

    return kernel


def _loss_sum(x1, x2, label, margin):
    """Pure-JAX sum of the per-row loss terms (used for the ragged tail)."""
    diff = x1.astype(jnp.float32) - x2.astype(jnp.float32) + _EPS
    sq = jnp.sum(diff * diff, axis=-1)
    dist = jnp.sqrt(sq)
    lbl = label.astype(jnp.float32)
    hinge = jnp.maximum(float(margin) - dist, 0.0)
    return jnp.sum(lbl * sq + (1.0 - lbl) * hinge * hinge)


def _reference(x1, x2, label, margin=1.0):
    return _loss_sum(x1, x2, label, margin) / x1.shape[0]


def contrastive_loss(output1, output2, label, margin=1.0,
                     max_rows_per_tile=None, num_cores=None):
    output1 = jnp.asarray(output1)
    output2 = jnp.asarray(output2)
    B, D = output1.shape
    label = jnp.asarray(label).reshape(B)

    itemsize = jnp.dtype(output1.dtype).itemsize
    d_pad = _round_up(max(D, 1), _LANE)
    # VMEM bytes per tile row: double-buffered x1/x2 blocks at their HBM dtype,
    # the f32 temporaries the kernel materializes (diff/sq over D plus the
    # lane-replicated per-row arrays), and the transposed label stream.
    bytes_per_row = (2 * 2 * d_pad * itemsize
                     + 2 * d_pad * 4
                     + 4 * _LANE * 4
                     + 2 * 8 * 4)
    tb_budget = max(8, min((_VMEM_TILE_BUDGET // bytes_per_row) // 8 * 8, _MAX_TB))
    if max_rows_per_tile is not None:
        tb_budget = max(8, min(tb_budget, _round_up(int(max_rows_per_tile), 8)))

    ncores = int(num_cores) if num_cores is not None else _num_tensorcores_per_device()
    ncores = max(1, ncores)

    B8 = (B // 8) * 8
    tb = tiles_per_core = 0
    if B8 == 0:
        bulk = 0                                    # batch too small for a tile
    else:
        n128 = B8 // _LANE
        if ncores > 1 and n128 < 2 * ncores:
            ncores = 1                              # too small to split across cores
        if ncores == 1 and (B8 <= tb_budget or n128 == 0):
            # Single tile covers the whole 8-aligned batch (best coverage; the
            # label block equals its full array, so no 128-alignment needed).
            tiles_per_core, tb = 1, B8
        else:
            # Multi-tile: tiles are multiples of 128 rows so the transposed
            # (1, bulk) label stream stays lane-aligned; rows split evenly
            # across cores (same tile count & size per core).
            tpb128 = max(1, tb_budget // _LANE)
            per_core = max(1, n128 // ncores)       # 128-row groups per core
            tiles_per_core = max(1, _cdiv(per_core, tpb128))
            tb = (per_core // tiles_per_core) * _LANE
        bulk = ncores * tiles_per_core * tb

    total = jnp.zeros((), jnp.float32)

    if bulk > 0:
        lbl2d = label[:bulk].astype(jnp.float32).reshape(1, bulk)
        tpc = tiles_per_core
        row_map = lambda c, i: (c * tpc + i, 0)
        lbl_map = lambda c, i: (0, c * tpc + i)

        est_vmem = (tb * bytes_per_row
                    + d_pad * _LANE * 4             # ones matrix for the MXU reduce
                    + ncores * 8 * _LANE * 4        # resident output accumulators
                    + (2 << 20))                    # headroom
        vmem_limit = max(_VMEM_LIMIT, min(int(est_vmem), 112 * 1024 * 1024))

        out = pl.pallas_call(
            _make_kernel(margin),
            out_shape=jax.ShapeDtypeStruct((ncores * 8, _LANE), jnp.float32),
            grid_spec=pltpu.PrefetchScalarGridSpec(
                num_scalar_prefetch=0,
                grid=(ncores, tiles_per_core),
                in_specs=[
                    pl.BlockSpec((tb, D), row_map),
                    pl.BlockSpec((tb, D), row_map),
                    pl.BlockSpec((1, tb), lbl_map),
                ],
                out_specs=pl.BlockSpec((8, _LANE), lambda c, i: (c, 0)),
            ),
            compiler_params=pltpu.CompilerParams(
                dimension_semantics=("parallel", "arbitrary"),
                vmem_limit_bytes=vmem_limit,
            ),
            cost_estimate=pl.CostEstimate(
                flops=2 * bulk * D * (_LANE + 2) + 8 * bulk * _LANE,
                transcendentals=bulk * _LANE,
                bytes_accessed=(2 * bulk * D * itemsize + bulk * 4
                                + ncores * 8 * _LANE * 4),
            ),
        )(output1, output2, lbl2d)

        # Kernel invariant: every element of core c's (8,128) tile holds that
        # core's partial sum, so one element per core is the exact partial.
        total = total + jnp.sum(out[0::8, 0])

    if bulk < B:
        # Ragged tail (< one tile of rows): tiny pure-JAX epilogue; never rely
        # on Pallas boundary-block garbage.
        total = total + _loss_sum(output1[bulk:], output2[bulk:], label[bulk:], margin)

    return total / B                                # mean over the TRUE batch size


if __name__ == "__main__":
    key = jax.random.PRNGKey(0)
    k1, k2, k3 = jax.random.split(key, 3)

    # 1) Small, nicely shaped batch: single-tile kernel path, no epilogue.
    B, D = 256, 32
    o1 = jax.random.normal(k1, (B, D), dtype=jnp.float32)
    o2 = jax.random.normal(k2, (B, D), dtype=jnp.float32)
    lb = jax.random.bernoulli(k3, 0.5, (B,)).astype(jnp.float32)
    loss = contrastive_loss(o1, o2, lb, margin=1.0)
    jax.block_until_ready(loss)
    ref = _reference(o1, o2, lb, margin=1.0)
    assert jnp.allclose(loss, ref, rtol=1e-5, atol=1e-5), (loss, ref)

    # 2) Awkward batch, bf16 inputs, forced small tiles: multi-tile accumulator
    #    plus pure-JAX ragged-tail epilogue.
    B2, D2 = 1000, 48
    o1b = jax.random.normal(k1, (B2, D2), dtype=jnp.bfloat16)
    o2b = jax.random.normal(k2, (B2, D2), dtype=jnp.bfloat16)
    lb2 = jax.random.bernoulli(k3, 0.5, (B2,)).astype(jnp.float32)
    loss2 = contrastive_loss(o1b, o2b, lb2, margin=1.0, max_rows_per_tile=128)
    jax.block_until_ready(loss2)
    ref2 = _reference(o1b, o2b, lb2, margin=1.0)
    assert jnp.allclose(loss2, ref2, rtol=2e-4, atol=2e-4), (loss2, ref2)

    # 3) Force the 2-core grid layout (correct on any chip; parallel on v7x).
    o1f = o1b.astype(jnp.float32)
    o2f = o2b.astype(jnp.float32)
    loss3 = contrastive_loss(o1f, o2f, lb2, margin=1.0,
                             max_rows_per_tile=256, num_cores=2)
    jax.block_until_ready(loss3)
    ref3 = _reference(o1f, o2f, lb2, margin=1.0)
    assert jnp.allclose(loss3, ref3, rtol=1e-5, atol=1e-5), (loss3, ref3)

    # 4) Tiny batch: 8-row single tile + 5-row pure-JAX tail.
    B4, D4 = 13, 160
    o1c = jax.random.normal(k1, (B4, D4), dtype=jnp.float32)
    o2c = jax.random.normal(k2, (B4, D4), dtype=jnp.float32)
    lb4 = jax.random.bernoulli(k3, 0.5, (B4,)).astype(jnp.float32)
    loss4 = contrastive_loss(o1c, o2c, lb4, margin=1.0)
    jax.block_until_ready(loss4)
    ref4 = _reference(o1c, o2c, lb4, margin=1.0)
    assert jnp.allclose(loss4, ref4, rtol=1e-5, atol=1e-5), (loss4, ref4)

    print("KERNEL_OK")
</pallas_src>

<mosaic_0001>
module attributes {stable_mosaic.version = 11 : i64} {
  func.func @kernel(%arg0: i32, %arg1: i32, %arg2: memref<256x32xf32, #tpu.memory_space<vmem>>, %arg3: memref<256x32xf32, #tpu.memory_space<vmem>>, %arg4: memref<1x256xf32, #tpu.memory_space<vmem>>, %arg5: memref<8x128xf32, #tpu.memory_space<vmem>>) attributes {dimension_semantics = [#tpu.dimension_semantics<parallel>, #tpu.dimension_semantics<arbitrary>], iteration_bounds = array<i64: 1, 1>, scalar_prefetch = 0 : i64, scratch_operands = 0 : i64, tpu.core_type = #tpu.core_type<tc>, window_params = [{transform_indices = @transform_0, window_bounds = array<i64: 256, 32>}, {transform_indices = @transform_1, window_bounds = array<i64: 256, 32>}, {transform_indices = @transform_2, window_bounds = array<i64: 1, 256>}, {transform_indices = @transform_3, window_bounds = array<i64: 8, 128>}]} {
    %c0_i32 = arith.constant 0 : i32
    %0 = arith.cmpi eq, %arg1, %c0_i32 : i32
    %1 = arith.extui %0 : i1 to i32
    %c0_i32_0 = arith.constant 0 : i32
    %2 = arith.cmpi ne, %1, %c0_i32_0 : i32
    scf.if %2 {
      %cst_17 = arith.constant 0.000000e+00 : f32
      %27 = vector.broadcast %cst_17 : f32 to vector<8x128xf32>
      %c0_18 = arith.constant 0 : index
      %c0_19 = arith.constant 0 : index
      %28 = vector.load %arg5[%c0_18, %c0_19] : memref<8x128xf32, #tpu.memory_space<vmem>>, vector<8x128xf32>
      tpu.vector_store %arg5[%c0_18, %c0_19], %27 {strides = array<i32>} : memref<8x128xf32, #tpu.memory_space<vmem>>, vector<8x128xf32>,
    } else {
    }
    %c0 = arith.constant 0 : index
    %c0_1 = arith.constant 0 : index
    %3 = vector.load %arg2[%c0, %c0_1] : memref<256x32xf32, #tpu.memory_space<vmem>>, vector<256x32xf32>
    %c0_2 = arith.constant 0 : index
    %c0_3 = arith.constant 0 : index
    %4 = vector.load %arg3[%c0_2, %c0_3] : memref<256x32xf32, #tpu.memory_space<vmem>>, vector<256x32xf32>
    %c0_4 = arith.constant 0 : index
    %c0_5 = arith.constant 0 : index
    %5 = vector.load %arg4[%c0_4, %c0_5] : memref<1x256xf32, #tpu.memory_space<vmem>>, vector<1x256xf32>
    %6 = arith.subf %3, %4 : vector<256x32xf32>
    %cst = arith.constant 9.99999997E-7 : f32
    %7 = vector.broadcast %cst : f32 to vector<256x32xf32>
    %8 = arith.addf %6, %7 : vector<256x32xf32>
    %9 = arith.mulf %8, %8 : vector<256x32xf32>
    %cst_6 = arith.constant 1.000000e+00 : f32
    %10 = vector.broadcast %cst_6 : f32 to vector<32x128xf32>
    %cst_7 = arith.constant dense<0.000000e+00> : vector<256x128xf32>
    %11 = tpu.matmul %9, %10, %cst_7 {dimension_numbers = #tpu.dot_dimension_numbers<[1], [0], [0], [1], [0, 0, 1, 1], [], []>} : vector<256x32xf32>, vector<32x128xf32>, vector<256x128xf32> -> vector<256x128xf32>
    %12 = math.sqrt %11 : vector<256x128xf32>
    %cst_8 = arith.constant 1.000000e+00 : f32
    %13 = vector.broadcast %cst_8 : f32 to vector<256x128xf32>
    %14 = arith.subf %13, %12 : vector<256x128xf32>
    %cst_9 = arith.constant 0.000000e+00 : f32
    %15 = vector.broadcast %cst_9 : f32 to vector<256x128xf32>
    %16 = arith.maximumf %14, %15 : vector<256x128xf32>
    %17 = arith.mulf %16, %16 : vector<256x128xf32>
    %cst_10 = arith.constant dense<0.000000e+00> : vector<1x128xf32>
    %18 = tpu.matmul %5, %11, %cst_10 {dimension_numbers = #tpu.dot_dimension_numbers<[1], [0], [0], [1], [0, 0, 1, 1], [], []>} : vector<1x256xf32>, vector<256x128xf32>, vector<1x128xf32> -> vector<1x128xf32>
    %cst_11 = arith.constant 1.000000e+00 : f32
    %19 = vector.broadcast %cst_11 : f32 to vector<1x256xf32>
    %20 = arith.subf %19, %5 : vector<1x256xf32>
    %cst_12 = arith.constant dense<0.000000e+00> : vector<1x128xf32>
    %21 = tpu.matmul %20, %17, %cst_12 {dimension_numbers = #tpu.dot_dimension_numbers<[1], [0], [0], [1], [0, 0, 1, 1], [], []>} : vector<1x256xf32>, vector<256x128xf32>, vector<1x128xf32> -> vector<1x128xf32>
    %c0_13 = arith.constant 0 : index
    %c0_14 = arith.constant 0 : index
    %22 = vector.load %arg5[%c0_13, %c0_14] : memref<8x128xf32, #tpu.memory_space<vmem>>, vector<8x128xf32>
    %23 = arith.addf %18, %21 : vector<1x128xf32>
    %24 = vector.broadcast %23 : vector<1x128xf32> to vector<8x128xf32>
    %25 = arith.addf %22, %24 : vector<8x128xf32>
    %c0_15 = arith.constant 0 : index
    %c0_16 = arith.constant 0 : index
    %26 = vector.load %arg5[%c0_15, %c0_16] : memref<8x128xf32, #tpu.memory_space<vmem>>, vector<8x128xf32>
    tpu.vector_store %arg5[%c0_15, %c0_16], %25 {strides = array<i32>} : memref<8x128xf32, #tpu.memory_space<vmem>>, vector<8x128xf32>,
    return
  }
  func.func @transform_0(%arg0: i32, %arg1: i32) -> (i32, i32) {
    %c1_i32 = arith.constant 1 : i32
    %0 = arith.muli %arg0, %c1_i32 : i32
    %1 = arith.addi %0, %arg1 : i32
    %c0_i32 = arith.constant 0 : i32
    %c0_i32_0 = arith.constant 0 : i32
    return %1, %c0_i32 : i32, i32
  }
  func.func @transform_1(%arg0: i32, %arg1: i32) -> (i32, i32) {
    %c1_i32 = arith.constant 1 : i32
    %0 = arith.muli %arg0, %c1_i32 : i32
    %1 = arith.addi %0, %arg1 : i32
    %c0_i32 = arith.constant 0 : i32
    %c0_i32_0 = arith.constant 0 : i32
    return %1, %c0_i32 : i32, i32
  }
  func.func @transform_2(%arg0: i32, %arg1: i32) -> (i32, i32) {
    %c1_i32 = arith.constant 1 : i32
    %0 = arith.muli %arg0, %c1_i32 : i32
    %1 = arith.addi %0, %arg1 : i32
    %c0_i32 = arith.constant 0 : i32
    %c0_i32_0 = arith.constant 0 : i32
    return %c0_i32, %1 : i32, i32
  }
  func.func @transform_3(%arg0: i32, %arg1: i32) -> (i32, i32) {
    %c0_i32 = arith.constant 0 : i32
    %c0_i32_0 = arith.constant 0 : i32
    return %arg0, %c0_i32 : i32, i32
  }
}

</mosaic_0001>

<llo_original>
// kernel: tpu_custom_call.1
$region0: #{tpu_custom_call.1}
  #allocation0 [shape = 'u32[]', space=smem, size = 0x4, offset = 0x4, fixed_abs, tag = 'smem constant byte address 0x4 - core index']
  #allocation1 [shape = 'u32[144,128]{1,0:T(1,128)}', space=vmem, size = 0x12000, scoped, tag = 'internal scratch']
  %s0 = inlined_call_operand.vmem [shape: f32[256,32], index: 0, kind: input, shape index: {}]
  %s1 = inlined_call_operand.vmem [shape: f32[256,32], index: 1, kind: input, shape index: {}]
  %s2 = inlined_call_operand.vmem [shape: f32[1,256], index: 2, kind: input, shape index: {}]
  %s3 = inlined_call_operand.hbm [shape: f32[8,128], index: 3, kind: output, shape index: {}]
  %s4 = sld [smem:[#allocation0]]
  $region26: #{tpu_custom_call.1} parent=0
    _
  %s6 = ssub.s32 1, %s4
  %s7 = scalar_select 0, %s6, %s4
  $region1: #{tpu_custom_call.1} parent=0
    #allocation2 [shape = 'u8[4096]{0}', space=vmem, size = 0x1000, scoped, tag = 'output window, operand 0, single buffered']
    #allocation3 [shape = 's32[1]{0}', space=sflag, size = 0x4, scoped, tag = 'scoped memory for tpu_custom_call.1']
    %8 = vsyncpa [#allocation3], 0
    // Predicated region
    $region2: #{tpu_custom_call.1} parent=1 // pred_check
      _
    $region3: #{tpu_custom_call.1} parent=1 // pred_check_branch
      %10 = sbr.rel (0) target = $region5
    $region4: #{tpu_custom_call.1} parent=1 // pred_region
      %s11 = sadd.s32 0, 0
      %s12 = smul.u32 32, %s11
      %p13 = scmp.lt.s32.totalorder %s12, 31
      %s14 = scalar_select %p13, %s12, 31
      %s15 = smul.addr %s14, 8
      %s16 = scalar_lea.vmem %s0, %s15
      %s17 = sadd.s32 0, 0
      %s18 = smul.u32 32, %s17
    $region5: #{tpu_custom_call.1} parent=1 // pred_fallthru
      _
    // Predicated region
    $region6: #{tpu_custom_call.1} parent=1 // pred_check
      _
    $region7: #{tpu_custom_call.1} parent=1 // pred_check_branch
      %20 = sbr.rel (0) target = $region9
    $region8: #{tpu_custom_call.1} parent=1 // pred_region
      %s21 = sadd.s32 0, 0
      %s22 = smul.u32 32, %s21
      %p23 = scmp.lt.s32.totalorder %s22, 31
      %s24 = scalar_select %p23, %s22, 31
      %s25 = smul.addr %s24, 8
      %s26 = scalar_lea.vmem %s1, %s25
      %s27 = sadd.s32 0, 0
      %s28 = smul.u32 32, %s27
    $region9: #{tpu_custom_call.1} parent=1 // pred_fallthru
      _
    // Predicated region
    $region10: #{tpu_custom_call.1} parent=1 // pred_check
      _
    $region11: #{tpu_custom_call.1} parent=1 // pred_check_branch
      %30 = sbr.rel (0) target = $region13
    $region12: #{tpu_custom_call.1} parent=1 // pred_region
      %s31 = sadd.s32 0, 0
      %s32 = smul.u32 2, %s31
      %p33 = scmp.lt.s32.totalorder %s32, 1
      %s34 = scalar_select %p33, %s32, 1
      %s35 = scalar_lea.vmem %s2, %s34
      %s36 = sadd.s32 0, 0
      %s37 = smul.u32 2, %s36
    $region13: #{tpu_custom_call.1} parent=1 // pred_fallthru
      _
    %s38 = sadd.s32 0, 0
    %s39 = smul.u32 32, %s38
    %p40 = scmp.lt.s32.totalorder %s39, 31
    %s41 = scalar_select %p40, %s39, 31
    %s42 = smul.addr %s41, 8
    %s43 = scalar_lea.vmem %s0, %s42
    %s44 = sadd.s32 0, 0
    %s45 = smul.u32 32, %s44
    %p46 = scmp.lt.s32.totalorder %s45, 31
    %s47 = scalar_select %p46, %s45, 31
    %s48 = smul.addr %s47, 8
    %s49 = scalar_lea.vmem %s1, %s48
    %s50 = sadd.s32 0, 0
    %s51 = smul.u32 2, %s50
    %p52 = scmp.lt.s32.totalorder %s51, 1
    %s53 = scalar_select %p52, %s51, 1
    %s54 = scalar_lea.vmem %s2, %s53
    %s55 = sadd.s32 0, 0
    %s56 = smul.u32 32, %s55
    %p57 = scmp.lt.s32.totalorder %s56, 31
    %s58 = scalar_select %p57, %s56, 31
    %s59 = smul.addr %s58, 8
    %s60 = scalar_lea.vmem %s0, %s59
    %s61 = sadd.s32 0, 0
    %s62 = smul.u32 32, %s61
    %s63 = sadd.s32 0, 0
    %s64 = smul.u32 32, %s63
    %p65 = scmp.lt.s32.totalorder %s64, 31
    %s66 = scalar_select %p65, %s64, 31
    %s67 = smul.addr %s66, 8
    %s68 = scalar_lea.vmem %s1, %s67
    %s69 = sadd.s32 0, 0
    %s70 = smul.u32 32, %s69
    %s71 = sadd.s32 0, 0
    %s72 = smul.u32 2, %s71
    %p73 = scmp.lt.s32.totalorder %s72, 1
    %s74 = scalar_select %p73, %s72, 1
    %s75 = scalar_lea.vmem %s2, %s74
    %s76 = sadd.s32 0, 0
    %s77 = smul.u32 2, %s76
    %p78 = scmp.eq.s32.totalorder 0, 0
    // Predicated region
    $region14: #{tpu_custom_call.1} parent=1 // pred_check
      %p79 = pneg %p78
    $region15: #{tpu_custom_call.1} parent=1 // pred_check_branch
      %81 = sbr.rel (%p79) target = $region17
    $region16: #{tpu_custom_call.1} parent=1 // pred_region
      %82 = vst [vmem:[#allocation2] sm:$0xff] 0.0
    $region17: #{tpu_custom_call.1} parent=1 // pred_fallthru
      _
    %v83 = vld [vmem:[%s60] sm:$0xff]
    %v84 = vld [vmem:[%s60 + $0x8] sm:$0xff]
    %v85 = vld [vmem:[%s60 + $0x10] sm:$0xff]
    %v86 = vld [vmem:[%s60 + $0x18] sm:$0xff]
    %v87 = vld [vmem:[%s60 + $0x20] sm:$0xff]
    %v88 = vld [vmem:[%s60 + $0x28] sm:$0xff]
    %v89 = vld [vmem:[%s60 + $0x30] sm:$0xff]
    %v90 = vld [vmem:[%s60 + $0x38] sm:$0xff]
    %v91 = vld [vmem:[%s60 + $0x40] sm:$0xff]
    %v92 = vld [vmem:[%s60 + $0x48] sm:$0xff]
    %v93 = vld [vmem:[%s60 + $0x50] sm:$0xff]
    %v94 = vld [vmem:[%s60 + $0x58] sm:$0xff]
    %v95 = vld [vmem:[%s60 + $0x60] sm:$0xff]
    %v96 = vld [vmem:[%s60 + $0x68] sm:$0xff]
    %v97 = vld [vmem:[%s60 + $0x70] sm:$0xff]
    %v98 = vld [vmem:[%s60 + $0x78] sm:$0xff]
    %v99 = vld [vmem:[%s60 + $0x80] sm:$0xff]
    %v100 = vld [vmem:[%s60 + $0x88] sm:$0xff]
    %v101 = vld [vmem:[%s60 + $0x90] sm:$0xff]
    %v102 = vld [vmem:[%s60 + $0x98] sm:$0xff]
    %v103 = vld [vmem:[%s60 + $0xa0] sm:$0xff]
    %v104 = vld [vmem:[%s60 + $0xa8] sm:$0xff]
    %v105 = vld [vmem:[%s60 + $0xb0] sm:$0xff]
    %v106 = vld [vmem:[%s60 + $0xb8] sm:$0xff]
    %v107 = vld [vmem:[%s60 + $0xc0] sm:$0xff]
    %v108 = vld [vmem:[%s60 + $0xc8] sm:$0xff]
    %v109 = vld [vmem:[%s60 + $0xd0] sm:$0xff]
    %v110 = vld [vmem:[%s60 + $0xd8] sm:$0xff]
    %v111 = vld [vmem:[%s60 + $0xe0] sm:$0xff]
    %v112 = vld [vmem:[%s60 + $0xe8] sm:$0xff]
    %v113 = vld [vmem:[%s60 + $0xf0] sm:$0xff]
    %v114 = vld [vmem:[%s60 + $0xf8] sm:$0xff]
    %v115 = vld [vmem:[%s68] sm:$0xff]
    %v116 = vld [vmem:[%s68 + $0x8] sm:$0xff]
    %v117 = vld [vmem:[%s68 + $0x10] sm:$0xff]
    %v118 = vld [vmem:[%s68 + $0x18] sm:$0xff]
    %v119 = vld [vmem:[%s68 + $0x20] sm:$0xff]
    %v120 = vld [vmem:[%s68 + $0x28] sm:$0xff]
    %v121 = vld [vmem:[%s68 + $0x30] sm:$0xff]
    %v122 = vld [vmem:[%s68 + $0x38] sm:$0xff]
    %v123 = vld [vmem:[%s68 + $0x40] sm:$0xff]
    %v124 = vld [vmem:[%s68 + $0x48] sm:$0xff]
    %v125 = vld [vmem:[%s68 + $0x50] sm:$0xff]
    %v126 = vld [vmem:[%s68 + $0x58] sm:$0xff]
    %v127 = vld [vmem:[%s68 + $0x60] sm:$0xff]
    %v128 = vld [vmem:[%s68 + $0x68] sm:$0xff]
    %v129 = vld [vmem:[%s68 + $0x70] sm:$0xff]
    %v130 = vld [vmem:[%s68 + $0x78] sm:$0xff]
    %v131 = vld [vmem:[%s68 + $0x80] sm:$0xff]
    %v132 = vld [vmem:[%s68 + $0x88] sm:$0xff]
    %v133 = vld [vmem:[%s68 + $0x90] sm:$0xff]
    %v134 = vld [vmem:[%s68 + $0x98] sm:$0xff]
    %v135 = vld [vmem:[%s68 + $0xa0] sm:$0xff]
    %v136 = vld [vmem:[%s68 + $0xa8] sm:$0xff]
    %v137 = vld [vmem:[%s68 + $0xb0] sm:$0xff]
    %v138 = vld [vmem:[%s68 + $0xb8] sm:$0xff]
    %v139 = vld [vmem:[%s68 + $0xc0] sm:$0xff]
    %v140 = vld [vmem:[%s68 + $0xc8] sm:$0xff]
    %v141 = vld [vmem:[%s68 + $0xd0] sm:$0xff]
    %v142 = vld [vmem:[%s68 + $0xd8] sm:$0xff]
    %v143 = vld [vmem:[%s68 + $0xe0] sm:$0xff]
    %v144 = vld [vmem:[%s68 + $0xe8] sm:$0xff]
    %v145 = vld [vmem:[%s68 + $0xf0] sm:$0xff]
    %v146 = vld [vmem:[%s68 + $0xf8] sm:$0xff]
    %v147 = vld [vmem:[%s75] sm:$0x3]
    %v148 = vsub.f32 %v83, %v115
    %v149 = vsub.f32 %v84, %v116
    %v150 = vsub.f32 %v85, %v117
    %v151 = vsub.f32 %v86, %v118
    %v152 = vsub.f32 %v87, %v119
    %v153 = vsub.f32 %v88, %v120
    %v154 = vsub.f32 %v89, %v121
    %v155 = vsub.f32 %v90, %v122
    %v156 = vsub.f32 %v91, %v123
    %v157 = vsub.f32 %v92, %v124
    %v158 = vsub.f32 %v93, %v125
    %v159 = vsub.f32 %v94, %v126
    %v160 = vsub.f32 %v95, %v127
    %v161 = vsub.f32 %v96, %v128
    %v162 = vsub.f32 %v97, %v129
    %v163 = vsub.f32 %v98, %v130
    %v164 = vsub.f32 %v99, %v131
    %v165 = vsub.f32 %v100, %v132
    %v166 = vsub.f32 %v101, %v133
    %v167 = vsub.f32 %v102, %v134
    %v168 = vsub.f32 %v103, %v135
    %v169 = vsub.f32 %v104, %v136
    %v170 = vsub.f32 %v105, %v137
    %v171 = vsub.f32 %v106, %v138
    %v172 = vsub.f32 %v107, %v139
    %v173 = vsub.f32 %v108, %v140
    %v174 = vsub.f32 %v109, %v141
    %v175 = vsub.f32 %v110, %v142
    %v176 = vsub.f32 %v111, %v143
    %v177 = vsub.f32 %v112, %v144
    %v178 = vsub.f32 %v113, %v145
    %v179 = vsub.f32 %v114, %v146
    %v180 = vadd.f32 %v148, 1e-06
    %v181 = vadd.f32 %v149, 1e-06
    %v182 = vadd.f32 %v150, 1e-06
    %v183 = vadd.f32 %v151, 1e-06
    %v184 = vadd.f32 %v152, 1e-06
    %v185 = vadd.f32 %v153, 1e-06
    %v186 = vadd.f32 %v154, 1e-06
    %v187 = vadd.f32 %v155, 1e-06
    %v188 = vadd.f32 %v156, 1e-06
    %v189 = vadd.f32 %v157, 1e-06
    %v190 = vadd.f32 %v158, 1e-06
    %v191 = vadd.f32 %v159, 1e-06
    %v192 = vadd.f32 %v160, 1e-06
    %v193 = vadd.f32 %v161, 1e-06
    %v194 = vadd.f32 %v162, 1e-06
    %v195 = vadd.f32 %v163, 1e-06
    %v196 = vadd.f32 %v164, 1e-06
    %v197 = vadd.f32 %v165, 1e-06
    %v198 = vadd.f32 %v166, 1e-06
    %v199 = vadd.f32 %v167, 1e-06
    %v200 = vadd.f32 %v168, 1e-06
    %v201 = vadd.f32 %v169, 1e-06
    %v202 = vadd.f32 %v170, 1e-06
    %v203 = vadd.f32 %v171, 1e-06
    %v204 = vadd.f32 %v172, 1e-06
    %v205 = vadd.f32 %v173, 1e-06
    %v206 = vadd.f32 %v174, 1e-06
    %v207 = vadd.f32 %v175, 1e-06
    %v208 = vadd.f32 %v176, 1e-06
    %v209 = vadd.f32 %v177, 1e-06
    %v210 = vadd.f32 %v178, 1e-06
    %v211 = vadd.f32 %v179, 1e-06
    %v212 = vmul.f32 %v180, %v180
    %v213 = vmul.f32 %v181, %v181
    %v214 = vmul.f32 %v182, %v182
    %v215 = vmul.f32 %v183, %v183
    %v216 = vmul.f32 %v184, %v184
    %v217 = vmul.f32 %v185, %v185
    %v218 = vmul.f32 %v186, %v186
    %v219 = vmul.f32 %v187, %v187
    %v220 = vmul.f32 %v188, %v188
    %v221 = vmul.f32 %v189, %v189
    %v222 = vmul.f32 %v190, %v190
    %v223 = vmul.f32 %v191, %v191
    %v224 = vmul.f32 %v192, %v192
    %v225 = vmul.f32 %v193, %v193
    %v226 = vmul.f32 %v194, %v194
    %v227 = vmul.f32 %v195, %v195
    %v228 = vmul.f32 %v196, %v196
    %v229 = vmul.f32 %v197, %v197
    %v230 = vmul.f32 %v198, %v198
    %v231 = vmul.f32 %v199, %v199
    %v232 = vmul.f32 %v200, %v200
    %v233 = vmul.f32 %v201, %v201
    %v234 = vmul.f32 %v202, %v202
    %v235 = vmul.f32 %v203, %v203
    %v236 = vmul.f32 %v204, %v204
    %v237 = vmul.f32 %v205, %v205
    %v238 = vmul.f32 %v206, %v206
    %v239 = vmul.f32 %v207, %v207
    %v240 = vmul.f32 %v208, %v208
    %v241 = vmul.f32 %v209, %v209
    %v242 = vmul.f32 %v210, %v210
    %v243 = vmul.f32 %v211, %v211
    %vm244 = vcmask 261120
    %v246 = vsel %vm244, %v212, 0
    %v249 = vsel %vm244, %v213, 0
    %v252 = vsel %vm244, %v214, 0
    %v255 = vsel %vm244, %v215, 0
    %v258 = vsel %vm244, %v216, 0
    %v261 = vsel %vm244, %v217, 0
    %v264 = vsel %vm244, %v218, 0
    %v267 = vsel %vm244, %v219, 0
    %v270 = vsel %vm244, %v220, 0
    %v273 = vsel %vm244, %v221, 0
    %v276 = vsel %vm244, %v222, 0
    %v279 = vsel %vm244, %v223, 0
    %v282 = vsel %vm244, %v224, 0
    %v285 = vsel %vm244, %v225, 0
    %v288 = vsel %vm244, %v226, 0
    %v291 = vsel %vm244, %v227, 0
    %v294 = vsel %vm244, %v228, 0
    %v297 = vsel %vm244, %v229, 0
    %v300 = vsel %vm244, %v230, 0
    %v303 = vsel %vm244, %v231, 0
    %v306 = vsel %vm244, %v232, 0
    %v309 = vsel %vm244, %v233, 0
    %v312 = vsel %vm244, %v234, 0
    %v315 = vsel %vm244, %v235, 0
    %v318 = vsel %vm244, %v236, 0
    %v321 = vsel %vm244, %v237, 0
    %v324 = vsel %vm244, %v238, 0
    %v327 = vsel %vm244, %v239, 0
    %v330 = vsel %vm244, %v240, 0
    %v333 = vsel %vm244, %v241, 0
    %v336 = vsel %vm244, %v242, 0
    %v339 = vsel %vm244, %v243, 0
    %341 = vmatprep.subr.mxu0 0.0
    %342 = vmatpush1.msra.mxu0 1.0
    %343 = vmatprep.subr.mxu0 0.0
    %344 = vmatpush1.msra.mxu0 1.0
    %345 = vmatprep.subr.mxu0 0.0
    %346 = vmatpush1.msra.mxu0 1.0
    %347 = vmatprep.subr.mxu0 0.0
    %348 = vmatpush1.msra.mxu0 1.0
    %349 = vmatprep.subr.mxu0 0.0
    %350 = vmatpush1.msra.mxu0 0.0
    %351 = vmatprep.subr.mxu0 0.0
    %352 = vmatpush1.msra.mxu0 0.0
    %353 = vmatprep.subr.mxu0 0.0
    %354 = vmatpush1.msra.mxu0 0.0
    %355 = vmatprep.subr.mxu0 0.0
    %356 = vmatpush1.msra.mxu0 0.0
    %357 = vmatprep.subr.mxu0 0.0
    %358 = vmatpush1.msra.mxu0 0.0
    %359 = vmatprep.subr.mxu0 0.0
    %360 = vmatpush1.msra.mxu0 0.0
    %361 = vmatprep.subr.mxu0 0.0
    %362 = vmatpush1.msra.mxu0 0.0
    %363 = vmatprep.subr.mxu0 0.0
    %364 = vmatpush1.msra.mxu0 0.0
    %365 = vmatprep.subr.mxu0 0.0
    %366 = vmatpush1.msra.mxu0 0.0
    %367 = vmatprep.subr.mxu0 0.0
    %368 = vmatpush1.msra.mxu0 0.0
    %369 = vmatprep.subr.mxu0 0.0
    %370 = vmatpush1.msra.mxu0 0.0
    %371 = vmatprep.subr.mxu0 0.0
    %372 = vmatpush1.msra.mxu0 0.0
    %373 = vmatprep.subr.mxu0 0.0
    %374 = vmatpush1.msra.mxu0 0.0
    %375 = vmatprep.subr.mxu0 0.0
    %376 = vmatpush1.msra.mxu0 0.0
    %377 = vmatprep.subr.mxu0 0.0
    %378 = vmatpush1.msra.mxu0 0.0
    %379 = vmatprep.subr.mxu0 0.0
    %380 = vmatpush1.msra.mxu0 0.0
    %381 = vmatprep.subr.mxu0 0.0
    %382 = vmatpush1.msra.mxu0 0.0
    %383 = vmatprep.subr.mxu0 0.0
    %384 = vmatpush1.msra.mxu0 0.0
    %385 = vmatprep.subr.mxu0 0.0
    %386 = vmatpush1.msra.mxu0 0.0
    %387 = vmatprep.subr.mxu0 0.0
    %388 = vmatpush1.msra.mxu0 0.0
    %389 = vmatprep.subr.mxu0 0.0
    %390 = vmatpush1.msra.mxu0 0.0
    %391 = vmatprep.subr.mxu0 0.0
    %392 = vmatpush1.msra.mxu0 0.0
    %393 = vmatprep.subr.mxu0 0.0
    %394 = vmatpush1.msra.mxu0 0.0
    %395 = vmatprep.subr.mxu0 0.0
    %396 = vmatpush1.msra.mxu0 0.0
    %397 = vmatprep.subr.mxu0 0.0
    %398 = vmatpush1.msra.mxu0 0.0
    %399 = vmatprep.subr.mxu0 0.0
    %400 = vmatpush1.msra.mxu0 0.0
    %401 = vmatprep.subr.mxu0 0.0
    %402 = vmatpush1.msra.mxu0 0.0
    %403 = vmatprep.subr.mxu0 0.0
    %404 = vmatpush1.msra.mxu0 0.0
    %405 = vmatprep.mubr.f32.mxu0 0.0
    %406 = vmatmul.mubr.f32.gmra.mrb[0].mxu0 %v246
    %v407 = vpop.f32.mrb[0].mxu0
    %v408 = vadd.f32 0.0, %v407
    %v409 = vpop.f32.mrb[0].mxu0
    %410 = vmatprep.mubr.f32.mxu0 0.0
    %411 = vmatmul.mubr.f32.gmra.mrb[0].mxu0 %v249
    %v412 = vpop.f32.mrb[0].mxu0
    %v413 = vadd.f32 0.0, %v412
    %v414 = vpop.f32.mrb[0].mxu0
    %415 = vmatprep.mubr.f32.mxu0 0.0
    %416 = vmatmul.mubr.f32.gmra.mrb[0].mxu0 %v252
    %v417 = vpop.f32.mrb[0].mxu0
    %v418 = vadd.f32 0.0, %v417
    %v419 = vpop.f32.mrb[0].mxu0
    %420 = vmatprep.mubr.f32.mxu0 0.0
    %421 = vmatmul.mubr.f32.gmra.mrb[0].mxu0 %v255
    %v422 = vpop.f32.mrb[0].mxu0
    %v423 = vadd.f32 0.0, %v422
    %v424 = vpop.f32.mrb[0].mxu0
    %425 = vmatprep.mubr.f32.mxu0 0.0
    %426 = vmatmul.mubr.f32.gmra.mrb[0].mxu0 %v258
    %v427 = vpop.f32.mrb[0].mxu0
    %v428 = vadd.f32 0.0, %v427
    %v429 = vpop.f32.mrb[0].mxu0
    %430 = vmatprep.mubr.f32.mxu0 0.0
    %431 = vmatmul.mubr.f32.gmra.mrb[0].mxu0 %v261
    %v432 = vpop.f32.mrb[0].mxu0
    %v433 = vadd.f32 0.0, %v432
    %v434 = vpop.f32.mrb[0].mxu0
    %435 = vmatprep.mubr.f32.mxu0 0.0
    %436 = vmatmul.mubr.f32.gmra.mrb[0].mxu0 %v264
    %v437 = vpop.f32.mrb[0].mxu0
    %v438 = vadd.f32 0.0, %v437
    %v439 = vpop.f32.mrb[0].mxu0
    %440 = vmatprep.mubr.f32.mxu0 0.0
    %441 = vmatmul.mubr.f32.gmra.mrb[0].mxu0 %v267
    %v442 = vpop.f32.mrb[0].mxu0
    %v443 = vadd.f32 0.0, %v442
    %v444 = vpop.f32.mrb[0].mxu0
    %445 = vmatprep.mubr.f32.mxu0 0.0
    %446 = vmatmul.mubr.f32.gmra.mrb[0].mxu0 %v270
    %v447 = vpop.f32.mrb[0].mxu0
    %v448 = vadd.f32 0.0, %v447
    %v449 = vpop.f32.mrb[0].mxu0
    %450 = vmatprep.mubr.f32.mxu0 0.0
    %451 = vmatmul.mubr.f32.gmra.mrb[0].mxu0 %v273
    %v452 = vpop.f32.mrb[0].mxu0
    %v453 = vadd.f32 0.0, %v452
    %v454 = vpop.f32.mrb[0].mxu0
    %455 = vmatprep.mubr.f32.mxu0 0.0
    %456 = vmatmul.mubr.f32.gmra.mrb[0].mxu0 %v276
    %v457 = vpop.f32.mrb[0].mxu0
    %v458 = vadd.f32 0.0, %v457
    %v459 = vpop.f32.mrb[0].mxu0
    %460 = vmatprep.mubr.f32.mxu0 0.0
    %461 = vmatmul.mubr.f32.gmra.mrb[0].mxu0 %v279
    %v462 = vpop.f32.mrb[0].mxu0
    %v463 = vadd.f32 0.0, %v462
    %v464 = vpop.f32.mrb[0].mxu0
    %465 = vmatprep.mubr.f32.mxu0 0.0
    %466 = vmatmul.mubr.f32.gmra.mrb[0].mxu0 %v282
    %v467 = vpop.f32.mrb[0].mxu0
    %v468 = vadd.f32 0.0, %v467
    %v469 = vpop.f32.mrb[0].mxu0
    %470 = vmatprep.mubr.f32.mxu0 0.0
    %471 = vmatmul.mubr.f32.gmra.mrb[0].mxu0 %v285
    %v472 = vpop.f32.mrb[0].mxu0
    %v473 = vadd.f32 0.0, %v472
    %v474 = vpop.f32.mrb[0].mxu0
    %475 = vmatprep.mubr.f32.mxu0 0.0
    %476 = vmatmul.mubr.f32.gmra.mrb[0].mxu0 %v288
    %v477 = vpop.f32.mrb[0].mxu0
    %v478 = vadd.f32 0.0, %v477
    %v479 = vpop.f32.mrb[0].mxu0
    %480 = vmatprep.mubr.f32.mxu0 0.0
    %481 = vmatmul.mubr.f32.gmra.mrb[0].mxu0 %v291
    %v482 = vpop.f32.mrb[0].mxu0
    %v483 = vadd.f32 0.0, %v482
    %v484 = vpop.f32.mrb[0].mxu0
    %485 = vmatprep.mubr.f32.mxu0 0.0
    %486 = vmatmul.mubr.f32.gmra.mrb[0].mxu0 %v294
    %v487 = vpop.f32.mrb[0].mxu0
    %v488 = vadd.f32 0.0, %v487
    %v489 = vpop.f32.mrb[0].mxu0
    %490 = vmatprep.mubr.f32.mxu0 0.0
    %491 = vmatmul.mubr.f32.gmra.mrb[0].mxu0 %v297
    %v492 = vpop.f32.mrb[0].mxu0
    %v493 = vadd.f32 0.0, %v492
    %v494 = vpop.f32.mrb[0].mxu0
    %495 = vmatprep.mubr.f32.mxu0 0.0
    %496 = vmatmul.mubr.f32.gmra.mrb[0].mxu0 %v300
    %v497 = vpop.f32.mrb[0].mxu0
    %v498 = vadd.f32 0.0, %v497
    %v499 = vpop.f32.mrb[0].mxu0
    %500 = vmatprep.mubr.f32.mxu0 0.0
    %501 = vmatmul.mubr.f32.gmra.mrb[0].mxu0 %v303
    %v502 = vpop.f32.mrb[0].mxu0
    %v503 = vadd.f32 0.0, %v502
    %v504 = vpop.f32.mrb[0].mxu0
    %505 = vmatprep.mubr.f32.mxu0 0.0
    %506 = vmatmul.mubr.f32.gmra.mrb[0].mxu0 %v306
    %v507 = vpop.f32.mrb[0].mxu0
    %v508 = vadd.f32 0.0, %v507
    %v509 = vpop.f32.mrb[0].mxu0
    %510 = vmatprep.mubr.f32.mxu0 0.0
    %511 = vmatmul.mubr.f32.gmra.mrb[0].mxu0 %v309
    %v512 = vpop.f32.mrb[0].mxu0
    %v513 = vadd.f32 0.0, %v512
    %v514 = vpop.f32.mrb[0].mxu0
    %515 = vmatprep.mubr.f32.mxu0 0.0
    %516 = vmatmul.mubr.f32.gmra.mrb[0].mxu0 %v312
    %v517 = vpop.f32.mrb[0].mxu0
    %v518 = vadd.f32 0.0, %v517
    %v519 = vpop.f32.mrb[0].mxu0
    %520 = vmatprep.mubr.f32.mxu0 0.0
    %521 = vmatmul.mubr.f32.gmra.mrb[0].mxu0 %v315
    %v522 = vpop.f32.mrb[0].mxu0
    %v523 = vadd.f32 0.0, %v522
    %v524 = vpop.f32.mrb[0].mxu0
    %525 = vmatprep.mubr.f32.mxu0 0.0
    %526 = vmatmul.mubr.f32.gmra.mrb[0].mxu0 %v318
    %v527 = vpop.f32.mrb[0].mxu0
    %v528 = vadd.f32 0.0, %v527
    %v529 = vpop.f32.mrb[0].mxu0
    %530 = vmatprep.mubr.f32.mxu0 0.0
    %531 = vmatmul.mubr.f32.gmra.mrb[0].mxu0 %v321
    %v532 = vpop.f32.mrb[0].mxu0
    %v533 = vadd.f32 0.0, %v532
    %v534 = vpop.f32.mrb[0].mxu0
    %535 = vmatprep.mubr.f32.mxu0 0.0
    %536 = vmatmul.mubr.f32.gmra.mrb[0].mxu0 %v324
    %v537 = vpop.f32.mrb[0].mxu0
    %v538 = vadd.f32 0.0, %v537
    %v539 = vpop.f32.mrb[0].mxu0
    %540 = vmatprep.mubr.f32.mxu0 0.0
    %541 = vmatmul.mubr.f32.gmra.mrb[0].mxu0 %v327
    %v542 = vpop.f32.mrb[0].mxu0
    %v543 = vadd.f32 0.0, %v542
    %v544 = vpop.f32.mrb[0].mxu0
    %545 = vmatprep.mubr.f32.mxu0 0.0
    %546 = vmatmul.mubr.f32.gmra.mrb[0].mxu0 %v330
    %v547 = vpop.f32.mrb[0].mxu0
    %v548 = vadd.f32 0.0, %v547
    %v549 = vpop.f32.mrb[0].mxu0
    %550 = vmatprep.mubr.f32.mxu0 0.0
    %551 = vmatmul.mubr.f32.gmra.mrb[0].mxu0 %v333
    %v552 = vpop.f32.mrb[0].mxu0
    %v553 = vadd.f32 0.0, %v552
    %v554 = vpop.f32.mrb[0].mxu0
    %555 = vmatprep.mubr.f32.mxu0 0.0
    %556 = vmatmul.mubr.f32.gmra.mrb[0].mxu0 %v336
    %v557 = vpop.f32.mrb[0].mxu0
    %v558 = vadd.f32 0.0, %v557
    %v559 = vpop.f32.mrb[0].mxu0
    %560 = vmatprep.mubr.f32.mxu0 0.0
    %561 = vmatmul.mubr.f32.gmra.mrb[0].mxu0 %v339
    %v562 = vpop.f32.mrb[0].mxu0
    %v563 = vadd.f32 0.0, %v562
    %v564 = vpop.f32.mrb[0].mxu0
    %565 = vdwg.mxu0
    %v566 = vrsqrt.pop %v408
    %v567 = vmul.f32 %v408, %v566
    %vm568 = vcmp.eq.f32.partialorder %v408, inf
    %v569 = vsel %vm568, %v408, %v567
    %vm570 = vcmp.eq.f32.partialorder %v408, 0.0
    %v571 = vand.u32 %v408, 2147483648
    %v572 = vsel %vm570, %v571, %v569
    %v573 = vrsqrt.pop %v413
    %v574 = vmul.f32 %v413, %v573
    %vm575 = vcmp.eq.f32.partialorder %v413, inf
    %v576 = vsel %vm575, %v413, %v574
    %vm577 = vcmp.eq.f32.partialorder %v413, 0.0
    %v578 = vand.u32 %v413, 2147483648
    %v579 = vsel %vm577, %v578, %v576
    %v580 = vrsqrt.pop %v418
    %v581 = vmul.f32 %v418, %v580
    %vm582 = vcmp.eq.f32.partialorder %v418, inf
    %v583 = vsel %vm582, %v418, %v581
    %vm584 = vcmp.eq.f32.partialorder %v418, 0.0
    %v585 = vand.u32 %v418, 2147483648
    %v586 = vsel %vm584, %v585, %v583
    %v587 = vrsqrt.pop %v423
    %v588 = vmul.f32 %v423, %v587
    %vm589 = vcmp.eq.f32.partialorder %v423, inf
    %v590 = vsel %vm589, %v423, %v588
    %vm591 = vcmp.eq.f32.partialorder %v423, 0.0
    %v592 = vand.u32 %v423, 2147483648
    %v593 = vsel %vm591, %v592, %v590
    %v594 = vrsqrt.pop %v428
    %v595 = vmul.f32 %v428, %v594
    %vm596 = vcmp.eq.f32.partialorder %v428, inf
    %v597 = vsel %vm596, %v428, %v595
    %vm598 = vcmp.eq.f32.partialorder %v428, 0.0
    %v599 = vand.u32 %v428, 2147483648
    %v600 = vsel %vm598, %v599, %v597
    %v601 = vrsqrt.pop %v433
    %v602 = vmul.f32 %v433, %v601
    %vm603 = vcmp.eq.f32.partialorder %v433, inf
    %v604 = vsel %vm603, %v433, %v602
    %vm605 = vcmp.eq.f32.partialorder %v433, 0.0
    %v606 = vand.u32 %v433, 2147483648
    %v607 = vsel %vm605, %v606, %v604
    %v608 = vrsqrt.pop %v438
    %v609 = vmul.f32 %v438, %v608
    %vm610 = vcmp.eq.f32.partialorder %v438, inf
    %v611 = vsel %vm610, %v438, %v609
    %vm612 = vcmp.eq.f32.partialorder %v438, 0.0
    %v613 = vand.u32 %v438, 2147483648
    %v614 = vsel %vm612, %v613, %v611
    %v615 = vrsqrt.pop %v443
    %v616 = vmul.f32 %v443, %v615
    %vm617 = vcmp.eq.f32.partialorder %v443, inf
    %v618 = vsel %vm617, %v443, %v616
    %vm619 = vcmp.eq.f32.partialorder %v443, 0.0
    %v620 = vand.u32 %v443, 2147483648
    %v621 = vsel %vm619, %v620, %v618
    %v622 = vrsqrt.pop %v448
    %v623 = vmul.f32 %v448, %v622
    %vm624 = vcmp.eq.f32.partialorder %v448, inf
    %v625 = vsel %vm624, %v448, %v623
    %vm626 = vcmp.eq.f32.partialorder %v448, 0.0
    %v627 = vand.u32 %v448, 2147483648
    %v628 = vsel %vm626, %v627, %v625
    %v629 = vrsqrt.pop %v453
    %v630 = vmul.f32 %v453, %v629
    %vm631 = vcmp.eq.f32.partialorder %v453, inf
    %v632 = vsel %vm631, %v453, %v630
    %vm633 = vcmp.eq.f32.partialorder %v453, 0.0
    %v634 = vand.u32 %v453, 2147483648
    %v635 = vsel %vm633, %v634, %v632
    %v636 = vrsqrt.pop %v458
    %v637 = vmul.f32 %v458, %v636
    %vm638 = vcmp.eq.f32.partialorder %v458, inf
    %v639 = vsel %vm638, %v458, %v637
    %vm640 = vcmp.eq.f32.partialorder %v458, 0.0
    %v641 = vand.u32 %v458, 2147483648
    %v642 = vsel %vm640, %v641, %v639
    %v643 = vrsqrt.pop %v463
    %v644 = vmul.f32 %v463, %v643
    %vm645 = vcmp.eq.f32.partialorder %v463, inf
    %v646 = vsel %vm645, %v463, %v644
    %vm647 = vcmp.eq.f32.partialorder %v463, 0.0
    %v648 = vand.u32 %v463, 2147483648
    %v649 = vsel %vm647, %v648, %v646
    %v650 = vrsqrt.pop %v468
    %v651 = vmul.f32 %v468, %v650
    %vm652 = vcmp.eq.f32.partialorder %v468, inf
    %v653 = vsel %vm652, %v468, %v651
    %vm654 = vcmp.eq.f32.partialorder %v468, 0.0
    %v655 = vand.u32 %v468, 2147483648
    %v656 = vsel %vm654, %v655, %v653
    %v657 = vrsqrt.pop %v473
    %v658 = vmul.f32 %v473, %v657
    %vm659 = vcmp.eq.f32.partialorder %v473, inf
    %v660 = vsel %vm659, %v473, %v658
    %vm661 = vcmp.eq.f32.partialorder %v473, 0.0
    %v662 = vand.u32 %v473, 2147483648
    %v663 = vsel %vm661, %v662, %v660
    %v664 = vrsqrt.pop %v478
    %v665 = vmul.f32 %v478, %v664
    %vm666 = vcmp.eq.f32.partialorder %v478, inf
    %v667 = vsel %vm666, %v478, %v665
    %vm668 = vcmp.eq.f32.partialorder %v478, 0.0
    %v669 = vand.u32 %v478, 2147483648
    %v670 = vsel %vm668, %v669, %v667
    %v671 = vrsqrt.pop %v483
    %v672 = vmul.f32 %v483, %v671
    %vm673 = vcmp.eq.f32.partialorder %v483, inf
    %v674 = vsel %vm673, %v483, %v672
    %vm675 = vcmp.eq.f32.partialorder %v483, 0.0
    %v676 = vand.u32 %v483, 2147483648
    %v677 = vsel %vm675, %v676, %v674
    %v678 = vrsqrt.pop %v488
    %v679 = vmul.f32 %v488, %v678
    %vm680 = vcmp.eq.f32.partialorder %v488, inf
    %v681 = vsel %vm680, %v488, %v679
    %vm682 = vcmp.eq.f32.partialorder %v488, 0.0
    %v683 = vand.u32 %v488, 2147483648
    %v684 = vsel %vm682, %v683, %v681
    %v685 = vrsqrt.pop %v493
    %v686 = vmul.f32 %v493, %v685
    %vm687 = vcmp.eq.f32.partialorder %v493, inf
    %v688 = vsel %vm687, %v493, %v686
    %vm689 = vcmp.eq.f32.partialorder %v493, 0.0
    %v690 = vand.u32 %v493, 2147483648
    %v691 = vsel %vm689, %v690, %v688
    %v692 = vrsqrt.pop %v498
    %v693 = vmul.f32 %v498, %v692
    %vm694 = vcmp.eq.f32.partialorder %v498, inf
    %v695 = vsel %vm694, %v498, %v693
    %vm696 = vcmp.eq.f32.partialorder %v498, 0.0
    %v697 = vand.u32 %v498, 2147483648
    %v698 = vsel %vm696, %v697, %v695
    %v699 = vrsqrt.pop %v503
    %v700 = vmul.f32 %v503, %v699
    %vm701 = vcmp.eq.f32.partialorder %v503, inf
    %v702 = vsel %vm701, %v503, %v700
    %vm703 = vcmp.eq.f32.partialorder %v503, 0.0
    %v704 = vand.u32 %v503, 2147483648
    %v705 = vsel %vm703, %v704, %v702
    %v706 = vrsqrt.pop %v508
    %v707 = vmul.f32 %v508, %v706
    %vm708 = vcmp.eq.f32.partialorder %v508, inf
    %v709 = vsel %vm708, %v508, %v707
    %vm710 = vcmp.eq.f32.partialorder %v508, 0.0
    %v711 = vand.u32 %v508, 2147483648
    %v712 = vsel %vm710, %v711, %v709
    %v713 = vrsqrt.pop %v513
    %v714 = vmul.f32 %v513, %v713
    %vm715 = vcmp.eq.f32.partialorder %v513, inf
    %v716 = vsel %vm715, %v513, %v714
    %vm717 = vcmp.eq.f32.partialorder %v513, 0.0
    %v718 = vand.u32 %v513, 2147483648
    %v719 = vsel %vm717, %v718, %v716
    %v720 = vrsqrt.pop %v518
    %v721 = vmul.f32 %v518, %v720
    %vm722 = vcmp.eq.f32.partialorder %v518, inf
    %v723 = vsel %vm722, %v518, %v721
    %vm724 = vcmp.eq.f32.partialorder %v518, 0.0
    %v725 = vand.u32 %v518, 2147483648
    %v726 = vsel %vm724, %v725, %v723
    %v727 = vrsqrt.pop %v523
    %v728 = vmul.f32 %v523, %v727
    %vm729 = vcmp.eq.f32.partialorder %v523, inf
    %v730 = vsel %vm729, %v523, %v728
    %vm731 = vcmp.eq.f32.partialorder %v523, 0.0
    %v732 = vand.u32 %v523, 2147483648
    %v733 = vsel %vm731, %v732, %v730
    %v734 = vrsqrt.pop %v528
    %v735 = vmul.f32 %v528, %v734
    %vm736 = vcmp.eq.f32.partialorder %v528, inf
    %v737 = vsel %vm736, %v528, %v735
    %vm738 = vcmp.eq.f32.partialorder %v528, 0.0
    %v739 = vand.u32 %v528, 2147483648
    %v740 = vsel %vm738, %v739, %v737
    %v741 = vrsqrt.pop %v533
    %v742 = vmul.f32 %v533, %v741
    %vm743 = vcmp.eq.f32.partialorder %v533, inf
    %v744 = vsel %vm743, %v533, %v742
    %vm745 = vcmp.eq.f32.partialorder %v533, 0.0
    %v746 = vand.u32 %v533, 2147483648
    %v747 = vsel %vm745, %v746, %v744
    %v748 = vrsqrt.pop %v538
    %v749 = vmul.f32 %v538, %v748
    %vm750 = vcmp.eq.f32.partialorder %v538, inf
    %v751 = vsel %vm750, %v538, %v749
    %vm752 = vcmp.eq.f32.partialorder %v538, 0.0
    %v753 = vand.u32 %v538, 2147483648
    %v754 = vsel %vm752, %v753, %v751
    %v755 = vrsqrt.pop %v543
    %v756 = vmul.f32 %v543, %v755
    %vm757 = vcmp.eq.f32.partialorder %v543, inf
    %v758 = vsel %vm757, %v543, %v756
    %vm759 = vcmp.eq.f32.partialorder %v543, 0.0
    %v760 = vand.u32 %v543, 2147483648
    %v761 = vsel %vm759, %v760, %v758
    %v762 = vrsqrt.pop %v548
    %v763 = vmul.f32 %v548, %v762
    %vm764 = vcmp.eq.f32.partialorder %v548, inf
    %v765 = vsel %vm764, %v548, %v763
    %vm766 = vcmp.eq.f32.partialorder %v548, 0.0
    %v767 = vand.u32 %v548, 2147483648
    %v768 = vsel %vm766, %v767, %v765
    %v769 = vrsqrt.pop %v553
    %v770 = vmul.f32 %v553, %v769
    %vm771 = vcmp.eq.f32.partialorder %v553, inf
    %v772 = vsel %vm771, %v553, %v770
    %vm773 = vcmp.eq.f32.partialorder %v553, 0.0
    %v774 = vand.u32 %v553, 2147483648
    %v775 = vsel %vm773, %v774, %v772
    %v776 = vrsqrt.pop %v558
    %v777 = vmul.f32 %v558, %v776
    %vm778 = vcmp.eq.f32.partialorder %v558, inf
    %v779 = vsel %vm778, %v558, %v777
    %vm780 = vcmp.eq.f32.partialorder %v558, 0.0
    %v781 = vand.u32 %v558, 2147483648
    %v782 = vsel %vm780, %v781, %v779
    %v783 = vrsqrt.pop %v563
    %v784 = vmul.f32 %v563, %v783
    %vm785 = vcmp.eq.f32.partialorder %v563, inf
    %v786 = vsel %vm785, %v563, %v784
    %vm787 = vcmp.eq.f32.partialorder %v563, 0.0
    %v788 = vand.u32 %v563, 2147483648
    %v789 = vsel %vm787, %v788, %v786
    %v790 = vsub.f32 1.0, %v572
    %v791 = vsub.f32 1.0, %v579
    %v792 = vsub.f32 1.0, %v586
    %v793 = vsub.f32 1.0, %v593
    %v794 = vsub.f32 1.0, %v600
    %v795 = vsub.f32 1.0, %v607
    %v796 = vsub.f32 1.0, %v614
    %v797 = vsub.f32 1.0, %v621
    %v798 = vsub.f32 1.0, %v628
    %v799 = vsub.f32 1.0, %v635
    %v800 = vsub.f32 1.0, %v642
    %v801 = vsub.f32 1.0, %v649
    %v802 = vsub.f32 1.0, %v656
    %v803 = vsub.f32 1.0, %v663
    %v804 = vsub.f32 1.0, %v670
    %v805 = vsub.f32 1.0, %v677
    %v806 = vsub.f32 1.0, %v684
    %v807 = vsub.f32 1.0, %v691
    %v808 = vsub.f32 1.0, %v698
    %v809 = vsub.f32 1.0, %v705
    %v810 = vsub.f32 1.0, %v712
    %v811 = vsub.f32 1.0, %v719
    %v812 = vsub.f32 1.0, %v726
    %v813 = vsub.f32 1.0, %v733
    %v814 = vsub.f32 1.0, %v740
    %v815 = vsub.f32 1.0, %v747
    %v816 = vsub.f32 1.0, %v754
    %v817 = vsub.f32 1.0, %v761
    %v818 = vsub.f32 1.0, %v768
    %v819 = vsub.f32 1.0, %v775
    %v820 = vsub.f32 1.0, %v782
    %v821 = vsub.f32 1.0, %v789
    %v822 = vmax.f32 %v790, 0.0
    %v823 = vmax.f32 %v791, 0.0
    %v824 = vmax.f32 %v792, 0.0
    %v825 = vmax.f32 %v793, 0.0
    %v826 = vmax.f32 %v794, 0.0
    %v827 = vmax.f32 %v795, 0.0
    %v828 = vmax.f32 %v796, 0.0
    %v829 = vmax.f32 %v797, 0.0
    %v830 = vmax.f32 %v798, 0.0
    %v831 = vmax.f32 %v799, 0.0
    %v832 = vmax.f32 %v800, 0.0
    %v833 = vmax.f32 %v801, 0.0
    %v834 = vmax.f32 %v802, 0.0
    %v835 = vmax.f32 %v803, 0.0
    %v836 = vmax.f32 %v804, 0.0
    %v837 = vmax.f32 %v805, 0.0
    %v838 = vmax.f32 %v806, 0.0
    %v839 = vmax.f32 %v807, 0.0
    %v840 = vmax.f32 %v808, 0.0
    %v841 = vmax.f32 %v809, 0.0
    %v842 = vmax.f32 %v810, 0.0
    %v843 = vmax.f32 %v811, 0.0
    %v844 = vmax.f32 %v812, 0.0
    %v845 = vmax.f32 %v813, 0.0
    %v846 = vmax.f32 %v814, 0.0
    %v847 = vmax.f32 %v815, 0.0
    %v848 = vmax.f32 %v816, 0.0
    %v849 = vmax.f32 %v817, 0.0
    %v850 = vmax.f32 %v818, 0.0
    %v851 = vmax.f32 %v819, 0.0
    %v852 = vmax.f32 %v820, 0.0
    %v853 = vmax.f32 %v821, 0.0
    %v854 = vmul.f32 %v822, %v822
    %v855 = vmul.f32 %v823, %v823
    %v856 = vmul.f32 %v824, %v824
    %v857 = vmul.f32 %v825, %v825
    %v858 = vmul.f32 %v826, %v826
    %v859 = vmul.f32 %v827, %v827
    %v860 = vmul.f32 %v828, %v828
    %v861 = vmul.f32 %v829, %v829
    %v862 = vmul.f32 %v830, %v830
    %v863 = vmul.f32 %v831, %v831
    %v864 = vmul.f32 %v832, %v832
    %v865 = vmul.f32 %v833, %v833
    %v866 = vmul.f32 %v834, %v834
    %v867 = vmul.f32 %v835, %v835
    %v868 = vmul.f32 %v836, %v836
    %v869 = vmul.f32 %v837, %v837
    %v870 = vmul.f32 %v838, %v838
    %v871 = vmul.f32 %v839, %v839
    %v872 = vmul.f32 %v840, %v840
    %v873 = vmul.f32 %v841, %v841
    %v874 = vmul.f32 %v842, %v842
    %v875 = vmul.f32 %v843, %v843
    %v876 = vmul.f32 %v844, %v844
    %v877 = vmul.f32 %v845, %v845
    %v878 = vmul.f32 %v846, %v846
    %v879 = vmul.f32 %v847, %v847
    %v880 = vmul.f32 %v848, %v848
    %v881 = vmul.f32 %v849, %v849
    %v882 = vmul.f32 %v850, %v850
    %v883 = vmul.f32 %v851, %v851
    %v884 = vmul.f32 %v852, %v852
    %v885 = vmul.f32 %v853, %v853
    %v886 = vsub.f32 1.0, %v147
    %v888 = vlaneseq
    %v889 = vshrl.u32 %v888, 7
    %v890 = vsub.s32 0, %v889
    %v891 = vrot.slane %v886, %v890
    %v892 = vlaneseq
    %v893 = vshrl.u32 %v892, 7
    %v894 = vsub.s32 1, %v893
    %v895 = vrot.slane %v886, %v894
    %898 = vmatprep.subr.mxu0 0.0
    %899 = vmatpush1.msra.mxu0 %v854
    %900 = vmatprep.subr.mxu0 0.0
    %901 = vmatpush1.msra.mxu0 %v855
    %902 = vmatprep.subr.mxu0 0.0
    %903 = vmatpush1.msra.mxu0 %v856
    %904 = vmatprep.subr.mxu0 0.0
    %905 = vmatpush1.msra.mxu0 %v857
    %906 = vmatprep.subr.mxu0 0.0
    %907 = vmatpush1.msra.mxu0 %v858
    %908 = vmatprep.subr.mxu0 0.0
    %909 = vmatpush1.msra.mxu0 %v859
    %910 = vmatprep.subr.mxu0 0.0
    %911 = vmatpush1.msra.mxu0 %v860
    %912 = vmatprep.subr.mxu0 0.0
    %913 = vmatpush1.msra.mxu0 %v861
    %914 = vmatprep.subr.mxu0 0.0
    %915 = vmatpush1.msra.mxu0 %v862
    %916 = vmatprep.subr.mxu0 0.0
    %917 = vmatpush1.msra.mxu0 %v863
    %918 = vmatprep.subr.mxu0 0.0
    %919 = vmatpush1.msra.mxu0 %v864
    %920 = vmatprep.subr.mxu0 0.0
    %921 = vmatpush1.msra.mxu0 %v865
    %922 = vmatprep.subr.mxu0 0.0
    %923 = vmatpush1.msra.mxu0 %v866
    %924 = vmatprep.subr.mxu0 0.0
    %925 = vmatpush1.msra.mxu0 %v867
    %926 = vmatprep.subr.mxu0 0.0
    %927 = vmatpush1.msra.mxu0 %v868
    %928 = vmatprep.subr.mxu0 0.0
    %929 = vmatpush1.msra.mxu0 %v869
    %930 = vmatprep.subr.mxu0 0.0
    %931 = vmatpush1.msra.mxu0 %v870
    %932 = vmatprep.subr.mxu0 0.0
    %933 = vmatpush1.msra.mxu0 %v871
    %934 = vmatprep.subr.mxu0 0.0
    %935 = vmatpush1.msra.mxu0 %v872
    %936 = vmatprep.subr.mxu0 0.0
    %937 = vmatpush1.msra.mxu0 %v873
    %938 = vmatprep.subr.mxu0 0.0
    %939 = vmatpush1.msra.mxu0 %v874
    %940 = vmatprep.subr.mxu0 0.0
    %941 = vmatpush1.msra.mxu0 %v875
    %942 = vmatprep.subr.mxu0 0.0
    %943 = vmatpush1.msra.mxu0 %v876
    %944 = vmatprep.subr.mxu0 0.0
    %945 = vmatpush1.msra.mxu0 %v877
    %946 = vmatprep.subr.mxu0 0.0
    %947 = vmatpush1.msra.mxu0 %v878
    %948 = vmatprep.subr.mxu0 0.0
    %949 = vmatpush1.msra.mxu0 %v879
    %950 = vmatprep.subr.mxu0 0.0
    %951 = vmatpush1.msra.mxu0 %v880
    %952 = vmatprep.subr.mxu0 0.0
    %953 = vmatpush1.msra.mxu0 %v881
    %954 = vmatprep.subr.mxu0 0.0
    %955 = vmatpush1.msra.mxu0 %v882
    %956 = vmatprep.subr.mxu0 0.0
    %957 = vmatpush1.msra.mxu0 %v883
    %958 = vmatprep.subr.mxu0 0.0
    %959 = vmatpush1.msra.mxu0 %v884
    %960 = vmatprep.subr.mxu0 0.0
    %961 = vmatpush1.msra.mxu0 %v885
    %962 = vmatprep.mubr.f32.mxu0 %v895
    %963 = vmatmul.mubr.f32.gmra.mrb[0].mxu0 %v891
    %v964 = vpop.f32.mrb[0].mxu0
    %v965 = vadd.f32 0.0, %v964
    %v966 = vpop.f32.mrb[0].mxu0
    %967 = vdwg.mxu0
    %v968 = vld [vmem:[#allocation2] sm:$0xff]
    %v970 = vlaneseq
    %v971 = vshrl.u32 %v970, 7
    %v972 = vsub.s32 0, %v971
    %v973 = vrot.slane %v147, %v972
    %v974 = vlaneseq
    %v975 = vshrl.u32 %v974, 7
    %v976 = vsub.s32 1, %v975
    %v977 = vrot.slane %v147, %v976
    %980 = vmatprep.subr.mxu0 0.0
    %981 = vmatpush1.msra.mxu0 %v408
    %982 = vmatprep.subr.mxu0 0.0
    %983 = vmatpush1.msra.mxu0 %v413
    %984 = vmatprep.subr.mxu0 0.0
    %985 = vmatpush1.msra.mxu0 %v418
    %986 = vmatprep.subr.mxu0 0.0
    %987 = vmatpush1.msra.mxu0 %v423
    %988 = vmatprep.subr.mxu0 0.0
    %989 = vmatpush1.msra.mxu0 %v428
    %990 = vmatprep.subr.mxu0 0.0
    %991 = vmatpush1.msra.mxu0 %v433
    %992 = vmatprep.subr.mxu0 0.0
    %993 = vmatpush1.msra.mxu0 %v438
    %994 = vmatprep.subr.mxu0 0.0
    %995 = vmatpush1.msra.mxu0 %v443
    %996 = vmatprep.subr.mxu0 0.0
    %997 = vmatpush1.msra.mxu0 %v448
    %998 = vmatprep.subr.mxu0 0.0
    %999 = vmatpush1.msra.mxu0 %v453
    %1000 = vmatprep.subr.mxu0 0.0
    %1001 = vmatpush1.msra.mxu0 %v458
    %1002 = vmatprep.subr.mxu0 0.0
    %1003 = vmatpush1.msra.mxu0 %v463
    %1004 = vmatprep.subr.mxu0 0.0
    %1005 = vmatpush1.msra.mxu0 %v468
    %1006 = vmatprep.subr.mxu0 0.0
    %1007 = vmatpush1.msra.mxu0 %v473
    %1008 = vmatprep.subr.mxu0 0.0
    %1009 = vmatpush1.msra.mxu0 %v478
    %1010 = vmatprep.subr.mxu0 0.0
    %1011 = vmatpush1.msra.mxu0 %v483
    %1012 = vmatprep.subr.mxu0 0.0
    %1013 = vmatpush1.msra.mxu0 %v488
    %1014 = vmatprep.subr.mxu0 0.0
    %1015 = vmatpush1.msra.mxu0 %v493
    %1016 = vmatprep.subr.mxu0 0.0
    %1017 = vmatpush1.msra.mxu0 %v498
    %1018 = vmatprep.subr.mxu0 0.0
    %1019 = vmatpush1.msra.mxu0 %v503
    %1020 = vmatprep.subr.mxu0 0.0
    %1021 = vmatpush1.msra.mxu0 %v508
    %1022 = vmatprep.subr.mxu0 0.0
    %1023 = vmatpush1.msra.mxu0 %v513
    %1024 = vmatprep.subr.mxu0 0.0
    %1025 = vmatpush1.msra.mxu0 %v518
    %1026 = vmatprep.subr.mxu0 0.0
    %1027 = vmatpush1.msra.mxu0 %v523
    %1028 = vmatprep.subr.mxu0 0.0
    %1029 = vmatpush1.msra.mxu0 %v528
    %1030 = vmatprep.subr.mxu0 0.0
    %1031 = vmatpush1.msra.mxu0 %v533
    %1032 = vmatprep.subr.mxu0 0.0
    %1033 = vmatpush1.msra.mxu0 %v538
    %1034 = vmatprep.subr.mxu0 0.0
    %1035 = vmatpush1.msra.mxu0 %v543
    %1036 = vmatprep.subr.mxu0 0.0
    %1037 = vmatpush1.msra.mxu0 %v548
    %1038 = vmatprep.subr.mxu0 0.0
    %1039 = vmatpush1.msra.mxu0 %v553
    %1040 = vmatprep.subr.mxu0 0.0
    %1041 = vmatpush1.msra.mxu0 %v558
    %1042 = vmatprep.subr.mxu0 0.0
    %1043 = vmatpush1.msra.mxu0 %v563
    %1044 = vmatprep.mubr.f32.mxu0 %v977
    %1045 = vmatmul.mubr.f32.gmra.mrb[0].mxu0 %v973
    %v1046 = vpop.f32.mrb[0].mxu0
    %v1047 = vadd.f32 %v965, %v1046
    %v1048 = vpop.f32.mrb[0].mxu0
    %1049 = vdwg.mxu0
    %v1050 = vlaneseq
    %v1051 = vshrl.u32 %v1050, 7
    %v1052 = vsub.s32 0, %v1051
    %v1053 = vrot.slane %v1047, %v1052
    %v1054 = vadd.f32 %v968, %v1053
    %1055 = vst [vmem:[#allocation2] sm:$0xff] %v1054
    // Predicated region
    $region18: #{tpu_custom_call.1} parent=1 // pred_check
      _
    $region19: #{tpu_custom_call.1} parent=1 // pred_check_branch
      %1057 = sbr.rel (0) target = $region21
    $region20: #{tpu_custom_call.1} parent=1 // pred_region
      %s1059 = ssub.s32 128, 128
      %1060 = vsyncadd [#allocation3], %s1059
      %s1062 = sshll.u32 [#allocation2], 4
      %s1063 = int_to_ptr.vmem [resolvable:$true] %s1062
      %1065 = dma.vmem_to_hbm [thread:$0]  %s1063, 128, %s3, [#allocation3]
    $region21: #{tpu_custom_call.1} parent=1 // pred_fallthru
      _
    // Predicated region
    $region22: #{tpu_custom_call.1} parent=1 // pred_check
      _
    $region23: #{tpu_custom_call.1} parent=1 // pred_check_branch
      %1067 = sbr.rel (0) target = $region25
    $region24: #{tpu_custom_call.1} parent=1 // pred_region
      %1068 = dma.done [#allocation3], 128
    $region25: #{tpu_custom_call.1} parent=1 // pred_fallthru
      _
    %1069 = vsyncpa [#allocation3], 1

</llo_original>
